<compile_context>
chip_gen: v7x
topology: tpu7x:2x2x1
jax: 0.10.0
libtpu: 0.0.40
codegen_flags: <defaults>
</compile_context>

<pallas_src>
import functools

import jax
import jax.numpy as jnp
from jax.experimental import pallas as pl
from jax.experimental.pallas import tpu as pltpu

LANES = 128
SUBLANES = 8


def _round_up(x, m):
    return (x + m - 1) // m * m


# ----------------------------- Pallas kernel --------------------------------
def _actor_kernel(x_ref, adj_ref, w_ref, out_ref, *, offs, F, Hg, Hm, A):
    x = x_ref[...]        # [BN, F]   (batch folded into rows)
    adj = adj_ref[...]    # [BN, BN]  block-diagonal adjacency

    def blk(name, rows, cols):
        o = offs[name]
        return w_ref[o:o + rows, 0:cols]   # static slice of the weight slab

    # --- IGNN: message aggregation (one matmul for the whole batch) ---
    agg = jnp.dot(adj, x, preferred_element_type=jnp.float32)           # [BN, F]

    # --- GNN node MLP layer 1: relu([x | agg] @ Wg1 + bg1) ---
    o1 = offs["wg1"]
    wg1a = w_ref[o1:o1 + F, 0:Hg]          # rows for x
    wg1b = w_ref[o1 + F:o1 + 2 * F, 0:Hg]  # rows for agg
    h1 = (jnp.dot(x, wg1a, preferred_element_type=jnp.float32)
          + jnp.dot(agg, wg1b, preferred_element_type=jnp.float32)
          + blk("bg1", 1, Hg))
    h1 = jnp.maximum(h1, 0.0)                                            # [BN, Hg]

    # --- GNN node MLP layer 2 ---
    node = jnp.maximum(
        jnp.dot(h1, blk("wg2", Hg, Hg), preferred_element_type=jnp.float32)
        + blk("bg2", 1, Hg), 0.0)                                        # [BN, Hg]

    # --- fused mu/sigma heads (MLPwoLastAct: Linear -> ReLU -> Linear) ---
    #   Wh1 = [wm1 | ws1]  ([Hg, 2Hm]);  Wh2 = blockdiag(wm2, ws2) ([2Hm, 2A])
    hh = jnp.maximum(
        jnp.dot(node, blk("wh1", Hg, 2 * Hm), preferred_element_type=jnp.float32)
        + blk("bh1", 1, 2 * Hm), 0.0)                                    # [BN, 2Hm]
    out = (jnp.dot(hh, blk("wh2", 2 * Hm, 2 * A), preferred_element_type=jnp.float32)
           + blk("bh2", 1, 2 * A))                                       # [BN, 2A]

    out_ref[...] = out.astype(out_ref.dtype)


# --------------------------- parameter packing -------------------------------
def pack_params(params):
    """Fuse + pad the 13 weight/bias tensors into one [R, 128] f32 slab.

    Row layout (all blocks 8-row aligned, 128-lane padded):
      wg1 [2F, Hg] = vstack(wg1a, wg1b)   bg1 [1, Hg]
      wg2 [Hg, Hg]                        bg2 [1, Hg]
      wh1 [Hg, 2Hm] = hstack(wm1, ws1)    bh1 [1, 2Hm] = hstack(bm1, bs1)
      wh2 [2Hm, 2A] = blockdiag(wm2, ws2) bh2 [1, 2A]  = hstack(bm2, bs2)
    """
    F = params["wg1a"].shape[0]
    Hg = params["wg2"].shape[0]
    Hm = params["wm1"].shape[1]
    A = params["wm2"].shape[1]

    wg1 = jnp.concatenate([params["wg1a"], params["wg1b"]], axis=0)
    wh1 = jnp.concatenate([params["wm1"], params["ws1"]], axis=1)
    bh1 = jnp.concatenate([params["bm1"], params["bs1"]], axis=1)
    wh2 = jnp.zeros((2 * Hm, 2 * A), jnp.float32)
    wh2 = wh2.at[:Hm, :A].set(params["wm2"])
    wh2 = wh2.at[Hm:, A:].set(params["ws2"])
    bh2 = jnp.concatenate([params["bm2"], params["bs2"]], axis=1)

    blocks = [
        ("wg1", wg1), ("bg1", params["bg1"]),
        ("wg2", params["wg2"]), ("bg2", params["bg2"]),
        ("wh1", wh1), ("bh1", bh1),
        ("wh2", wh2), ("bh2", bh2),
    ]
    offs, rows, padded = {}, 0, []
    for name, arr in blocks:
        offs[name] = rows
        r = _round_up(arr.shape[0], SUBLANES)
        buf = jnp.zeros((r, LANES), jnp.float32)
        buf = buf.at[:arr.shape[0], :arr.shape[1]].set(arr.astype(jnp.float32))
        padded.append(buf)
        rows += r
    slab = jnp.concatenate(padded, axis=0)
    dims = dict(F=F, Hg=Hg, Hm=Hm, A=A)
    return slab, offs, dims


# ------------------------------ wrapper --------------------------------------
def actor_forward(state, adj_bd, slab, offs, dims):
    """state: [B, N, F]; adj_bd: [B*N, B*N] block-diag adjacency; slab: packed
    parameters.  Returns (mu, sigma), each [B, N, A]."""
    B, N, F = state.shape
    A = dims["A"]
    x2d = state.reshape(B * N, F)

    kernel = functools.partial(_actor_kernel, offs=offs, **dims)
    vmem = lambda: pl.BlockSpec(memory_space=pltpu.MemorySpace.VMEM)

    out = pl.pallas_call(
        kernel,
        out_shape=jax.ShapeDtypeStruct((B * N, 2 * A), jnp.float32),
        in_specs=[vmem(), vmem(), vmem()],
        out_specs=vmem(),
    )(x2d, adj_bd, slab)

    out = out.reshape(B, N, 2 * A)
    return out[..., :A], out[..., A:]


# --------------------------- param construction ------------------------------
def xavier_uniform(key, fan_in, fan_out):
    bound = (6.0 / (fan_in + fan_out)) ** 0.5
    return jax.random.uniform(key, (fan_in, fan_out), jnp.float32, -bound, bound)


def init_params(key, F, Hg, Hm, A):
    ks = jax.random.split(key, 7)
    return {
        # gnn node MLP: [x, agg] (2F) -> Hg -> Hg
        "wg1a": xavier_uniform(ks[0], F, Hg),
        "wg1b": xavier_uniform(ks[1], F, Hg),
        "bg1":  jnp.zeros((1, Hg), jnp.float32),
        "wg2":  xavier_uniform(ks[2], Hg, Hg),
        "bg2":  jnp.zeros((1, Hg), jnp.float32),
        # mu head: Hg -> Hm -> A (no last activation)
        "wm1":  xavier_uniform(ks[3], Hg, Hm),
        "bm1":  jnp.zeros((1, Hm), jnp.float32),
        "wm2":  xavier_uniform(ks[4], Hm, A),
        "bm2":  jnp.zeros((1, A), jnp.float32),
        # sigma head
        "ws1":  xavier_uniform(ks[5], Hg, Hm),
        "bs1":  jnp.zeros((1, Hm), jnp.float32),
        "ws2":  xavier_uniform(ks[6], Hm, A),
        "bs2":  jnp.zeros((1, A), jnp.float32),
    }


def actor_forward_ref(state, adj, p):
    """Pure-JAX reference for correctness."""
    agg = jnp.einsum("ij,bjf->bif", adj, state)
    h1 = jax.nn.relu(state @ p["wg1a"] + agg @ p["wg1b"] + p["bg1"])
    h = jax.nn.relu(h1 @ p["wg2"] + p["bg2"])
    mu = jax.nn.relu(h @ p["wm1"] + p["bm1"]) @ p["wm2"] + p["bm2"]
    sigma = jax.nn.relu(h @ p["ws1"] + p["bs1"]) @ p["ws2"] + p["bs2"]
    return mu, sigma


if __name__ == "__main__":
    B, N, F = 2, 8, 16      # batch, graph nodes, node-feature dim
    Hg, Hm, A = 32, 32, 4   # gnn hidden, mlp hidden, action dim

    key = jax.random.PRNGKey(0)
    k_state, k_params = jax.random.split(key)

    state = jax.random.normal(k_state, (B, N, F), jnp.float32)
    # fully-connected normalized adjacency (no self loops)
    adj = (jnp.ones((N, N), jnp.float32) - jnp.eye(N, dtype=jnp.float32)) / (N - 1)
    params = init_params(k_params, F, Hg, Hm, A)

    # One-time setup (layout plumbing): packed weight slab + block-diag adjacency.
    slab, offs, dims = pack_params(params)
    adj_bd = jnp.kron(jnp.eye(B, dtype=jnp.float32), adj)

    mu, sigma = actor_forward(state, adj_bd, slab, offs, dims)
    jax.block_until_ready((mu, sigma))

    mu_ref, sigma_ref = actor_forward_ref(state, adj, params)
    assert jnp.allclose(mu, mu_ref, atol=1e-4, rtol=1e-4)
    assert jnp.allclose(sigma, sigma_ref, atol=1e-4, rtol=1e-4)

    print("KERNEL_OK")
</pallas_src>

<mosaic_0001>
module attributes {stable_mosaic.version = 11 : i64} {
  func.func @_actor_kernel(%arg0: memref<16x16xf32, #tpu.memory_space<vmem>>, %arg1: memref<16x16xf32, #tpu.memory_space<vmem>>, %arg2: memref<192x128xf32, #tpu.memory_space<vmem>>, %arg3: memref<16x8xf32, #tpu.memory_space<vmem>>) attributes {dimension_semantics = [], scalar_prefetch = 0 : i64, scratch_operands = 0 : i64, tpu.core_type = #tpu.core_type<tc>} {
    %c0 = arith.constant 0 : index
    %c0_0 = arith.constant 0 : index
    %0 = vector.load %arg0[%c0, %c0_0] : memref<16x16xf32, #tpu.memory_space<vmem>>, vector<16x16xf32>
    %c0_1 = arith.constant 0 : index
    %c0_2 = arith.constant 0 : index
    %1 = vector.load %arg1[%c0_1, %c0_2] : memref<16x16xf32, #tpu.memory_space<vmem>>, vector<16x16xf32>
    %cst = arith.constant dense<0.000000e+00> : vector<16x16xf32>
    %2 = tpu.matmul %1, %0, %cst {dimension_numbers = #tpu.dot_dimension_numbers<[1], [0], [0], [1], [0, 0, 1, 1], [], []>} : vector<16x16xf32>, vector<16x16xf32>, vector<16x16xf32> -> vector<16x16xf32>
    %c0_3 = arith.constant 0 : index
    %c0_4 = arith.constant 0 : index
    %3 = vector.load %arg2[%c0_3, %c0_4] : memref<192x128xf32, #tpu.memory_space<vmem>>, vector<16x32xf32>
    %c16 = arith.constant 16 : index
    %c0_5 = arith.constant 0 : index
    %4 = vector.load %arg2[%c16, %c0_5] : memref<192x128xf32, #tpu.memory_space<vmem>>, vector<16x32xf32>
    %cst_6 = arith.constant dense<0.000000e+00> : vector<16x32xf32>
    %5 = tpu.matmul %0, %3, %cst_6 {dimension_numbers = #tpu.dot_dimension_numbers<[1], [0], [0], [1], [0, 0, 1, 1], [], []>} : vector<16x16xf32>, vector<16x32xf32>, vector<16x32xf32> -> vector<16x32xf32>
    %cst_7 = arith.constant dense<0.000000e+00> : vector<16x32xf32>
    %6 = tpu.matmul %2, %4, %cst_7 {dimension_numbers = #tpu.dot_dimension_numbers<[1], [0], [0], [1], [0, 0, 1, 1], [], []>} : vector<16x16xf32>, vector<16x32xf32>, vector<16x32xf32> -> vector<16x32xf32>
    %7 = arith.addf %5, %6 : vector<16x32xf32>
    %c32 = arith.constant 32 : index
    %c0_8 = arith.constant 0 : index
    %8 = vector.load %arg2[%c32, %c0_8] : memref<192x128xf32, #tpu.memory_space<vmem>>, vector<1x32xf32>
    %9 = vector.broadcast %8 : vector<1x32xf32> to vector<16x32xf32>
    %10 = arith.addf %7, %9 : vector<16x32xf32>
    %cst_9 = arith.constant 0.000000e+00 : f32
    %11 = vector.broadcast %cst_9 : f32 to vector<16x32xf32>
    %12 = arith.maximumf %10, %11 : vector<16x32xf32>
    %c40 = arith.constant 40 : index
    %c0_10 = arith.constant 0 : index
    %13 = vector.load %arg2[%c40, %c0_10] : memref<192x128xf32, #tpu.memory_space<vmem>>, vector<32x32xf32>
    %cst_11 = arith.constant dense<0.000000e+00> : vector<16x32xf32>
    %14 = tpu.matmul %12, %13, %cst_11 {dimension_numbers = #tpu.dot_dimension_numbers<[1], [0], [0], [1], [0, 0, 1, 1], [], []>} : vector<16x32xf32>, vector<32x32xf32>, vector<16x32xf32> -> vector<16x32xf32>
    %c72 = arith.constant 72 : index
    %c0_12 = arith.constant 0 : index
    %15 = vector.load %arg2[%c72, %c0_12] : memref<192x128xf32, #tpu.memory_space<vmem>>, vector<1x32xf32>
    %16 = vector.broadcast %15 : vector<1x32xf32> to vector<16x32xf32>
    %17 = arith.addf %14, %16 : vector<16x32xf32>
    %cst_13 = arith.constant 0.000000e+00 : f32
    %18 = vector.broadcast %cst_13 : f32 to vector<16x32xf32>
    %19 = arith.maximumf %17, %18 : vector<16x32xf32>
    %c80 = arith.constant 80 : index
    %c0_14 = arith.constant 0 : index
    %20 = vector.load %arg2[%c80, %c0_14] : memref<192x128xf32, #tpu.memory_space<vmem>>, vector<32x64xf32>
    %cst_15 = arith.constant dense<0.000000e+00> : vector<16x64xf32>
    %21 = tpu.matmul %19, %20, %cst_15 {dimension_numbers = #tpu.dot_dimension_numbers<[1], [0], [0], [1], [0, 0, 1, 1], [], []>} : vector<16x32xf32>, vector<32x64xf32>, vector<16x64xf32> -> vector<16x64xf32>
    %c112 = arith.constant 112 : index
    %c0_16 = arith.constant 0 : index
    %22 = vector.load %arg2[%c112, %c0_16] : memref<192x128xf32, #tpu.memory_space<vmem>>, vector<1x64xf32>
    %23 = vector.broadcast %22 : vector<1x64xf32> to vector<16x64xf32>
    %24 = arith.addf %21, %23 : vector<16x64xf32>
    %cst_17 = arith.constant 0.000000e+00 : f32
    %25 = vector.broadcast %cst_17 : f32 to vector<16x64xf32>
    %26 = arith.maximumf %24, %25 : vector<16x64xf32>
    %c120 = arith.constant 120 : index
    %c0_18 = arith.constant 0 : index
    %27 = vector.load %arg2[%c120, %c0_18] : memref<192x128xf32, #tpu.memory_space<vmem>>, vector<64x8xf32>
    %cst_19 = arith.constant dense<0.000000e+00> : vector<16x8xf32>
    %28 = tpu.matmul %26, %27, %cst_19 {dimension_numbers = #tpu.dot_dimension_numbers<[1], [0], [0], [1], [0, 0, 1, 1], [], []>} : vector<16x64xf32>, vector<64x8xf32>, vector<16x8xf32> -> vector<16x8xf32>
    %c184 = arith.constant 184 : index
    %c0_20 = arith.constant 0 : index
    %29 = vector.load %arg2[%c184, %c0_20] : memref<192x128xf32, #tpu.memory_space<vmem>>, vector<1x8xf32>
    %30 = vector.broadcast %29 : vector<1x8xf32> to vector<16x8xf32>
    %31 = arith.addf %28, %30 : vector<16x8xf32>
    %c0_21 = arith.constant 0 : index
    %c0_22 = arith.constant 0 : index
    %32 = vector.load %arg3[%c0_21, %c0_22] : memref<16x8xf32, #tpu.memory_space<vmem>>, vector<16x8xf32>
    tpu.vector_store %arg3[%c0_21, %c0_22], %31 {strides = array<i32>} : memref<16x8xf32, #tpu.memory_space<vmem>>, vector<16x8xf32>,
    return
  }
}

</mosaic_0001>

<llo_original>
// kernel: tpu_custom_call.1
$region0: #{tpu_custom_call.1}
  #allocation0 [shape = 'u32[]', space=smem, size = 0x4, offset = 0x4, fixed_abs, tag = 'smem constant byte address 0x4 - core index']
  #allocation1 [shape = 'u32[144,128]{1,0:T(1,128)}', space=vmem, size = 0x12000, scoped, tag = 'internal scratch']
  %s0 = inlined_call_operand.hbm [shape: f32[16,16], index: 0, kind: input, shape index: {}]
  %s1 = inlined_call_operand.hbm [shape: f32[16,16], index: 1, kind: input, shape index: {}]
  %s2 = inlined_call_operand.hbm [shape: f32[192,128], index: 2, kind: input, shape index: {}]
  %s3 = inlined_call_operand.vmem [shape: f32[16,8], index: 3, kind: output, shape index: {}]
  %s4 = sld [smem:[#allocation0]]
  $region34: #{tpu_custom_call.1} parent=0
    _
  %s6 = ssub.s32 1, %s4
  %s7 = scalar_select 0, %s6, %s4
  $region1: #{tpu_custom_call.1} parent=0
    #allocation2 [shape = 'u8[8192]{0}', space=vmem, size = 0x2000, scoped, tag = 'input window, operand 0, single buffered']
    #allocation3 [shape = 's32[1]{0}', space=sflag, size = 0x4, scoped, tag = 'scoped memory for tpu_custom_call.1']
    #allocation4 [shape = 'u8[8192]{0}', space=vmem, size = 0x2000, scoped, tag = 'input window, operand 1, single buffered']
    #allocation5 [shape = 's32[1]{0}', space=sflag, size = 0x4, scoped, tag = 'scoped memory for tpu_custom_call.1']
    #allocation6 [shape = 'u8[98304]{0}', space=vmem, size = 0x18000, scoped, tag = 'input window, operand 2, single buffered']
    %8 = vsyncpa [#allocation3], 0
    %9 = vsyncpa [#allocation5], 0
    // Predicated region
    $region2: #{tpu_custom_call.1} parent=1 // pred_check
      _
    $region3: #{tpu_custom_call.1} parent=1 // pred_check_branch
      %11 = sbr.rel (0) target = $region5
    $region4: #{tpu_custom_call.1} parent=1 // pred_region
      %s13 = ssub.s32 256, 256
      %14 = vsyncadd [#allocation3], %s13
      %s15 = sshll.u32 [#allocation2], 4
      %s16 = int_to_ptr.vmem [resolvable:$true] %s15
      %21 = dma.hbm_to_vmem [thread:$0]  %s0, 256, %s16, [#allocation3], 128, 128, 8
    $region5: #{tpu_custom_call.1} parent=1 // pred_fallthru
      _
    // Predicated region
    $region6: #{tpu_custom_call.1} parent=1 // pred_check
      _
    $region7: #{tpu_custom_call.1} parent=1 // pred_check_branch
      %23 = sbr.rel (0) target = $region9
    $region8: #{tpu_custom_call.1} parent=1 // pred_region
      %s25 = ssub.s32 256, 256
      %26 = vsyncadd [#allocation5], %s25
      %s27 = sshll.u32 [#allocation4], 4
      %s28 = int_to_ptr.vmem [resolvable:$true] %s27
      %33 = dma.hbm_to_vmem [thread:$0]  %s1, 256, %s28, [#allocation5], 128, 128, 8
    $region9: #{tpu_custom_call.1} parent=1 // pred_fallthru
      _
    // Predicated region
    $region10: #{tpu_custom_call.1} parent=1 // pred_check
      _
    $region11: #{tpu_custom_call.1} parent=1 // pred_check_branch
      %35 = sbr.rel (0) target = $region13
    $region12: #{tpu_custom_call.1} parent=1 // pred_region
      %s37 = ssub.s32 3072, 3072
      %38 = vsyncadd [#allocation5], %s37
      %s39 = sshll.u32 [#allocation6], 4
      %s40 = int_to_ptr.vmem [resolvable:$true] %s39
      %45 = dma.hbm_to_vmem [thread:$0]  %s2, 3072, %s40, [#allocation5], 128, 128, 8
    $region13: #{tpu_custom_call.1} parent=1 // pred_fallthru
      _
    // Predicated region
    $region14: #{tpu_custom_call.1} parent=1 // pred_check
      _
    $region15: #{tpu_custom_call.1} parent=1 // pred_check_branch
      %47 = sbr.rel (0) target = $region17
    $region16: #{tpu_custom_call.1} parent=1 // pred_region
      %48 = dma.done [#allocation3], 256
    $region17: #{tpu_custom_call.1} parent=1 // pred_fallthru
      _
    // Predicated region
    $region18: #{tpu_custom_call.1} parent=1 // pred_check
      _
    $region19: #{tpu_custom_call.1} parent=1 // pred_check_branch
      %50 = sbr.rel (0) target = $region21
    $region20: #{tpu_custom_call.1} parent=1 // pred_region
      %51 = dma.done [#allocation5], 256
    $region21: #{tpu_custom_call.1} parent=1 // pred_fallthru
      _
    // Predicated region
    $region22: #{tpu_custom_call.1} parent=1 // pred_check
      _
    $region23: #{tpu_custom_call.1} parent=1 // pred_check_branch
      %53 = sbr.rel (0) target = $region25
    $region24: #{tpu_custom_call.1} parent=1 // pred_region
      %54 = dma.done [#allocation5], 3072
    $region25: #{tpu_custom_call.1} parent=1 // pred_fallthru
      _
    %v55 = vld [vmem:[#allocation2] sm:$0xff]
    %v56 = vld [vmem:[#allocation2 + $0x8] sm:$0xff]
    %v57 = vld [vmem:[#allocation4] sm:$0xff]
    %v58 = vld [vmem:[#allocation4 + $0x8] sm:$0xff]
    %vm59 = vcmask 130048
    %v61 = vsel %vm59, %v57, 0
    %v64 = vsel %vm59, %v58, 0
    %66 = vmatprep.subr.mxu0 0.0
    %67 = vmatpush1.msra.mxu0 %v55
    %68 = vmatprep.subr.mxu0 0.0
    %69 = vmatpush1.msra.mxu0 %v56
    %70 = vmatprep.subr.mxu0 0.0
    %71 = vmatpush1.msra.mxu0 0.0
    %72 = vmatprep.subr.mxu0 0.0
    %73 = vmatpush1.msra.mxu0 0.0
    %74 = vmatprep.subr.mxu0 0.0
    %75 = vmatpush1.msra.mxu0 0.0
    %76 = vmatprep.subr.mxu0 0.0
    %77 = vmatpush1.msra.mxu0 0.0
    %78 = vmatprep.subr.mxu0 0.0
    %79 = vmatpush1.msra.mxu0 0.0
    %80 = vmatprep.subr.mxu0 0.0
    %81 = vmatpush1.msra.mxu0 0.0
    %82 = vmatprep.subr.mxu0 0.0
    %83 = vmatpush1.msra.mxu0 0.0
    %84 = vmatprep.subr.mxu0 0.0
    %85 = vmatpush1.msra.mxu0 0.0
    %86 = vmatprep.subr.mxu0 0.0
    %87 = vmatpush1.msra.mxu0 0.0
    %88 = vmatprep.subr.mxu0 0.0
    %89 = vmatpush1.msra.mxu0 0.0
    %90 = vmatprep.subr.mxu0 0.0
    %91 = vmatpush1.msra.mxu0 0.0
    %92 = vmatprep.subr.mxu0 0.0
    %93 = vmatpush1.msra.mxu0 0.0
    %94 = vmatprep.subr.mxu0 0.0
    %95 = vmatpush1.msra.mxu0 0.0
    %96 = vmatprep.subr.mxu0 0.0
    %97 = vmatpush1.msra.mxu0 0.0
    %98 = vmatprep.subr.mxu0 0.0
    %99 = vmatpush1.msra.mxu0 0.0
    %100 = vmatprep.subr.mxu0 0.0
    %101 = vmatpush1.msra.mxu0 0.0
    %102 = vmatprep.subr.mxu0 0.0
    %103 = vmatpush1.msra.mxu0 0.0
    %104 = vmatprep.subr.mxu0 0.0
    %105 = vmatpush1.msra.mxu0 0.0
    %106 = vmatprep.subr.mxu0 0.0
    %107 = vmatpush1.msra.mxu0 0.0
    %108 = vmatprep.subr.mxu0 0.0
    %109 = vmatpush1.msra.mxu0 0.0
    %110 = vmatprep.subr.mxu0 0.0
    %111 = vmatpush1.msra.mxu0 0.0
    %112 = vmatprep.subr.mxu0 0.0
    %113 = vmatpush1.msra.mxu0 0.0
    %114 = vmatprep.subr.mxu0 0.0
    %115 = vmatpush1.msra.mxu0 0.0
    %116 = vmatprep.subr.mxu0 0.0
    %117 = vmatpush1.msra.mxu0 0.0
    %118 = vmatprep.subr.mxu0 0.0
    %119 = vmatpush1.msra.mxu0 0.0
    %120 = vmatprep.subr.mxu0 0.0
    %121 = vmatpush1.msra.mxu0 0.0
    %122 = vmatprep.subr.mxu0 0.0
    %123 = vmatpush1.msra.mxu0 0.0
    %124 = vmatprep.subr.mxu0 0.0
    %125 = vmatpush1.msra.mxu0 0.0
    %126 = vmatprep.subr.mxu0 0.0
    %127 = vmatpush1.msra.mxu0 0.0
    %128 = vmatprep.subr.mxu0 0.0
    %129 = vmatpush1.msra.mxu0 0.0
    %130 = vmatprep.mubr.f32.mxu0 0.0
    %131 = vmatmul.mubr.f32.gmra.mrb[0].mxu0 %v61
    %v132 = vpop.f32.mrb[0].mxu0
    %v133 = vadd.f32 0.0, %v132
    %v134 = vpop.f32.mrb[0].mxu0
    %135 = vmatprep.mubr.f32.mxu0 0.0
    %136 = vmatmul.mubr.f32.gmra.mrb[0].mxu0 %v64
    %v137 = vpop.f32.mrb[0].mxu0
    %v138 = vadd.f32 0.0, %v137
    %v139 = vpop.f32.mrb[0].mxu0
    %140 = vdwg.mxu0
    %v141 = vld [vmem:[#allocation6] sm:$0xff]
    %v142 = vld [vmem:[#allocation6 + $0x8] sm:$0xff]
    %v143 = vld [vmem:[#allocation6 + $0x10] sm:$0xff]
    %v144 = vld [vmem:[#allocation6 + $0x18] sm:$0xff]
    %v146 = vsel %vm59, %v133, 0
    %v149 = vsel %vm59, %v138, 0
    %151 = vmatprep.subr.mxu0 0.0
    %152 = vmatpush1.msra.mxu0 %v143
    %153 = vmatprep.subr.mxu0 0.0
    %154 = vmatpush1.msra.mxu0 %v144
    %155 = vmatprep.subr.mxu0 0.0
    %156 = vmatpush1.msra.mxu0 0.0
    %157 = vmatprep.subr.mxu0 0.0
    %158 = vmatpush1.msra.mxu0 0.0
    %159 = vmatprep.subr.mxu0 0.0
    %160 = vmatpush1.msra.mxu0 0.0
    %161 = vmatprep.subr.mxu0 0.0
    %162 = vmatpush1.msra.mxu0 0.0
    %163 = vmatprep.subr.mxu0 0.0
    %164 = vmatpush1.msra.mxu0 0.0
    %165 = vmatprep.subr.mxu0 0.0
    %166 = vmatpush1.msra.mxu0 0.0
    %167 = vmatprep.subr.mxu0 0.0
    %168 = vmatpush1.msra.mxu0 0.0
    %169 = vmatprep.subr.mxu0 0.0
    %170 = vmatpush1.msra.mxu0 0.0
    %171 = vmatprep.subr.mxu0 0.0
    %172 = vmatpush1.msra.mxu0 0.0
    %173 = vmatprep.subr.mxu0 0.0
    %174 = vmatpush1.msra.mxu0 0.0
    %175 = vmatprep.subr.mxu0 0.0
    %176 = vmatpush1.msra.mxu0 0.0
    %177 = vmatprep.subr.mxu0 0.0
    %178 = vmatpush1.msra.mxu0 0.0
    %179 = vmatprep.subr.mxu0 0.0
    %180 = vmatpush1.msra.mxu0 0.0
    %181 = vmatprep.subr.mxu0 0.0
    %182 = vmatpush1.msra.mxu0 0.0
    %183 = vmatprep.subr.mxu0 0.0
    %184 = vmatpush1.msra.mxu0 0.0
    %185 = vmatprep.subr.mxu0 0.0
    %186 = vmatpush1.msra.mxu0 0.0
    %187 = vmatprep.subr.mxu0 0.0
    %188 = vmatpush1.msra.mxu0 0.0
    %189 = vmatprep.subr.mxu0 0.0
    %190 = vmatpush1.msra.mxu0 0.0
    %191 = vmatprep.subr.mxu0 0.0
    %192 = vmatpush1.msra.mxu0 0.0
    %193 = vmatprep.subr.mxu0 0.0
    %194 = vmatpush1.msra.mxu0 0.0
    %195 = vmatprep.subr.mxu0 0.0
    %196 = vmatpush1.msra.mxu0 0.0
    %197 = vmatprep.subr.mxu0 0.0
    %198 = vmatpush1.msra.mxu0 0.0
    %199 = vmatprep.subr.mxu0 0.0
    %200 = vmatpush1.msra.mxu0 0.0
    %201 = vmatprep.subr.mxu0 0.0
    %202 = vmatpush1.msra.mxu0 0.0
    %203 = vmatprep.subr.mxu0 0.0
    %204 = vmatpush1.msra.mxu0 0.0
    %205 = vmatprep.subr.mxu0 0.0
    %206 = vmatpush1.msra.mxu0 0.0
    %207 = vmatprep.subr.mxu0 0.0
    %208 = vmatpush1.msra.mxu0 0.0
    %209 = vmatprep.subr.mxu0 0.0
    %210 = vmatpush1.msra.mxu0 0.0
    %211 = vmatprep.subr.mxu0 0.0
    %212 = vmatpush1.msra.mxu0 0.0
    %213 = vmatprep.subr.mxu0 0.0
    %214 = vmatpush1.msra.mxu0 0.0
    %215 = vmatprep.mubr.f32.mxu0 0.0
    %216 = vmatmul.mubr.f32.gmra.mrb[0].mxu0 %v146
    %v217 = vpop.f32.mrb[0].mxu0
    %v218 = vadd.f32 0.0, %v217
    %v219 = vpop.f32.mrb[0].mxu0
    %220 = vmatprep.mubr.f32.mxu0 0.0
    %221 = vmatmul.mubr.f32.gmra.mrb[0].mxu0 %v149
    %v222 = vpop.f32.mrb[0].mxu0
    %v223 = vadd.f32 0.0, %v222
    %v224 = vpop.f32.mrb[0].mxu0
    %225 = vdwg.mxu0
    %v227 = vsel %vm59, %v55, 0
    %v230 = vsel %vm59, %v56, 0
    %232 = vmatprep.subr.mxu0 0.0
    %233 = vmatpush1.msra.mxu0 %v141
    %234 = vmatprep.subr.mxu0 0.0
    %235 = vmatpush1.msra.mxu0 %v142
    %236 = vmatprep.subr.mxu0 0.0
    %237 = vmatpush1.msra.mxu0 0.0
    %238 = vmatprep.subr.mxu0 0.0
    %239 = vmatpush1.msra.mxu0 0.0
    %240 = vmatprep.subr.mxu0 0.0
    %241 = vmatpush1.msra.mxu0 0.0
    %242 = vmatprep.subr.mxu0 0.0
    %243 = vmatpush1.msra.mxu0 0.0
    %244 = vmatprep.subr.mxu0 0.0
    %245 = vmatpush1.msra.mxu0 0.0
    %246 = vmatprep.subr.mxu0 0.0
    %247 = vmatpush1.msra.mxu0 0.0
    %248 = vmatprep.subr.mxu0 0.0
    %249 = vmatpush1.msra.mxu0 0.0
    %250 = vmatprep.subr.mxu0 0.0
    %251 = vmatpush1.msra.mxu0 0.0
    %252 = vmatprep.subr.mxu0 0.0
    %253 = vmatpush1.msra.mxu0 0.0
    %254 = vmatprep.subr.mxu0 0.0
    %255 = vmatpush1.msra.mxu0 0.0
    %256 = vmatprep.subr.mxu0 0.0
    %257 = vmatpush1.msra.mxu0 0.0
    %258 = vmatprep.subr.mxu0 0.0
    %259 = vmatpush1.msra.mxu0 0.0
    %260 = vmatprep.subr.mxu0 0.0
    %261 = vmatpush1.msra.mxu0 0.0
    %262 = vmatprep.subr.mxu0 0.0
    %263 = vmatpush1.msra.mxu0 0.0
    %264 = vmatprep.subr.mxu0 0.0
    %265 = vmatpush1.msra.mxu0 0.0
    %266 = vmatprep.subr.mxu0 0.0
    %267 = vmatpush1.msra.mxu0 0.0
    %268 = vmatprep.subr.mxu0 0.0
    %269 = vmatpush1.msra.mxu0 0.0
    %270 = vmatprep.subr.mxu0 0.0
    %271 = vmatpush1.msra.mxu0 0.0
    %272 = vmatprep.subr.mxu0 0.0
    %273 = vmatpush1.msra.mxu0 0.0
    %274 = vmatprep.subr.mxu0 0.0
    %275 = vmatpush1.msra.mxu0 0.0
    %276 = vmatprep.subr.mxu0 0.0
    %277 = vmatpush1.msra.mxu0 0.0
    %278 = vmatprep.subr.mxu0 0.0
    %279 = vmatpush1.msra.mxu0 0.0
    %280 = vmatprep.subr.mxu0 0.0
    %281 = vmatpush1.msra.mxu0 0.0
    %282 = vmatprep.subr.mxu0 0.0
    %283 = vmatpush1.msra.mxu0 0.0
    %284 = vmatprep.subr.mxu0 0.0
    %285 = vmatpush1.msra.mxu0 0.0
    %286 = vmatprep.subr.mxu0 0.0
    %287 = vmatpush1.msra.mxu0 0.0
    %288 = vmatprep.subr.mxu0 0.0
    %289 = vmatpush1.msra.mxu0 0.0
    %290 = vmatprep.subr.mxu0 0.0
    %291 = vmatpush1.msra.mxu0 0.0
    %292 = vmatprep.subr.mxu0 0.0
    %293 = vmatpush1.msra.mxu0 0.0
    %294 = vmatprep.subr.mxu0 0.0
    %295 = vmatpush1.msra.mxu0 0.0
    %296 = vmatprep.mubr.f32.mxu0 0.0
    %297 = vmatmul.mubr.f32.gmra.mrb[0].mxu0 %v227
    %v298 = vpop.f32.mrb[0].mxu0
    %v299 = vadd.f32 %v218, %v298
    %v300 = vpop.f32.mrb[0].mxu0
    %301 = vmatprep.mubr.f32.mxu0 0.0
    %302 = vmatmul.mubr.f32.gmra.mrb[0].mxu0 %v230
    %v303 = vpop.f32.mrb[0].mxu0
    %v304 = vadd.f32 %v223, %v303
    %v305 = vpop.f32.mrb[0].mxu0
    %306 = vdwg.mxu0
    %v307 = vld [vmem:[#allocation6 + $0x20] sm:$0x1]
    %v308 = vlaneseq
    %v309 = vshrl.u32 %v308, 7
    %v310 = vsub.s32 0, %v309
    %v311 = vrot.slane %v307, %v310
    %v312 = vadd.f32 %v299, %v311
    %v313 = vadd.f32 %v304, %v311
    %v314 = vmax.f32 %v312, 0.0
    %v315 = vmax.f32 %v313, 0.0
    %v316 = vld [vmem:[#allocation6 + $0x28] sm:$0xff]
    %v317 = vld [vmem:[#allocation6 + $0x30] sm:$0xff]
    %v318 = vld [vmem:[#allocation6 + $0x38] sm:$0xff]
    %v319 = vld [vmem:[#allocation6 + $0x40] sm:$0xff]
    %v320 = vld [vmem:[#allocation6 + $0x48] sm:$0x1]
    %v321 = vlaneseq
    %v322 = vshrl.u32 %v321, 7
    %v323 = vsub.s32 0, %v322
    %v324 = vrot.slane %v320, %v323
    %vm325 = vcmask 261120
    %v327 = vsel %vm325, %v314, 0
    %v330 = vsel %vm325, %v315, 0
    %332 = vmatprep.subr.mxu0 0.0
    %333 = vmatpush1.msra.mxu0 %v316
    %334 = vmatprep.subr.mxu0 0.0
    %335 = vmatpush1.msra.mxu0 %v317
    %336 = vmatprep.subr.mxu0 0.0
    %337 = vmatpush1.msra.mxu0 %v318
    %338 = vmatprep.subr.mxu0 0.0
    %339 = vmatpush1.msra.mxu0 %v319
    %340 = vmatprep.subr.mxu0 0.0
    %341 = vmatpush1.msra.mxu0 0.0
    %342 = vmatprep.subr.mxu0 0.0
    %343 = vmatpush1.msra.mxu0 0.0
    %344 = vmatprep.subr.mxu0 0.0
    %345 = vmatpush1.msra.mxu0 0.0
    %346 = vmatprep.subr.mxu0 0.0
    %347 = vmatpush1.msra.mxu0 0.0
    %348 = vmatprep.subr.mxu0 0.0
    %349 = vmatpush1.msra.mxu0 0.0
    %350 = vmatprep.subr.mxu0 0.0
    %351 = vmatpush1.msra.mxu0 0.0
    %352 = vmatprep.subr.mxu0 0.0
    %353 = vmatpush1.msra.mxu0 0.0
    %354 = vmatprep.subr.mxu0 0.0
    %355 = vmatpush1.msra.mxu0 0.0
    %356 = vmatprep.subr.mxu0 0.0
    %357 = vmatpush1.msra.mxu0 0.0
    %358 = vmatprep.subr.mxu0 0.0
    %359 = vmatpush1.msra.mxu0 0.0
    %360 = vmatprep.subr.mxu0 0.0
    %361 = vmatpush1.msra.mxu0 0.0
    %362 = vmatprep.subr.mxu0 0.0
    %363 = vmatpush1.msra.mxu0 0.0
    %364 = vmatprep.subr.mxu0 0.0
    %365 = vmatpush1.msra.mxu0 0.0
    %366 = vmatprep.subr.mxu0 0.0
    %367 = vmatpush1.msra.mxu0 0.0
    %368 = vmatprep.subr.mxu0 0.0
    %369 = vmatpush1.msra.mxu0 0.0
    %370 = vmatprep.subr.mxu0 0.0
    %371 = vmatpush1.msra.mxu0 0.0
    %372 = vmatprep.subr.mxu0 0.0
    %373 = vmatpush1.msra.mxu0 0.0
    %374 = vmatprep.subr.mxu0 0.0
    %375 = vmatpush1.msra.mxu0 0.0
    %376 = vmatprep.subr.mxu0 0.0
    %377 = vmatpush1.msra.mxu0 0.0
    %378 = vmatprep.subr.mxu0 0.0
    %379 = vmatpush1.msra.mxu0 0.0
    %380 = vmatprep.subr.mxu0 0.0
    %381 = vmatpush1.msra.mxu0 0.0
    %382 = vmatprep.subr.mxu0 0.0
    %383 = vmatpush1.msra.mxu0 0.0
    %384 = vmatprep.subr.mxu0 0.0
    %385 = vmatpush1.msra.mxu0 0.0
    %386 = vmatprep.subr.mxu0 0.0
    %387 = vmatpush1.msra.mxu0 0.0
    %388 = vmatprep.subr.mxu0 0.0
    %389 = vmatpush1.msra.mxu0 0.0
    %390 = vmatprep.subr.mxu0 0.0
    %391 = vmatpush1.msra.mxu0 0.0
    %392 = vmatprep.subr.mxu0 0.0
    %393 = vmatpush1.msra.mxu0 0.0
    %394 = vmatprep.subr.mxu0 0.0
    %395 = vmatpush1.msra.mxu0 0.0
    %396 = vmatprep.mubr.f32.mxu0 0.0
    %397 = vmatmul.mubr.f32.gmra.mrb[0].mxu0 %v327
    %v398 = vpop.f32.mrb[0].mxu0
    %v399 = vadd.f32 %v324, %v398
    %v400 = vpop.f32.mrb[0].mxu0
    %401 = vmatprep.mubr.f32.mxu0 0.0
    %402 = vmatmul.mubr.f32.gmra.mrb[0].mxu0 %v330
    %v403 = vpop.f32.mrb[0].mxu0
    %v404 = vadd.f32 %v324, %v403
    %v405 = vpop.f32.mrb[0].mxu0
    %406 = vdwg.mxu0
    %v407 = vmax.f32 %v399, 0.0
    %v408 = vmax.f32 %v404, 0.0
    %v409 = vld [vmem:[#allocation6 + $0x50] sm:$0xff]
    %v410 = vld [vmem:[#allocation6 + $0x58] sm:$0xff]
    %v411 = vld [vmem:[#allocation6 + $0x60] sm:$0xff]
    %v412 = vld [vmem:[#allocation6 + $0x68] sm:$0xff]
    %v413 = vld [vmem:[#allocation6 + $0x70] sm:$0x1]
    %v414 = vlaneseq
    %v415 = vshrl.u32 %v414, 7
    %v416 = vsub.s32 0, %v415
    %v417 = vrot.slane %v413, %v416
    %v419 = vsel %vm325, %v407, 0
    %v422 = vsel %vm325, %v408, 0
    %424 = vmatprep.subr.mxu0 0.0
    %425 = vmatpush1.msra.mxu0 %v409
    %426 = vmatprep.subr.mxu0 0.0
    %427 = vmatpush1.msra.mxu0 %v410
    %428 = vmatprep.subr.mxu0 0.0
    %429 = vmatpush1.msra.mxu0 %v411
    %430 = vmatprep.subr.mxu0 0.0
    %431 = vmatpush1.msra.mxu0 %v412
    %432 = vmatprep.subr.mxu0 0.0
    %433 = vmatpush1.msra.mxu0 0.0
    %434 = vmatprep.subr.mxu0 0.0
    %435 = vmatpush1.msra.mxu0 0.0
    %436 = vmatprep.subr.mxu0 0.0
    %437 = vmatpush1.msra.mxu0 0.0
    %438 = vmatprep.subr.mxu0 0.0
    %439 = vmatpush1.msra.mxu0 0.0
    %440 = vmatprep.subr.mxu0 0.0
    %441 = vmatpush1.msra.mxu0 0.0
    %442 = vmatprep.subr.mxu0 0.0
    %443 = vmatpush1.msra.mxu0 0.0
    %444 = vmatprep.subr.mxu0 0.0
    %445 = vmatpush1.msra.mxu0 0.0
    %446 = vmatprep.subr.mxu0 0.0
    %447 = vmatpush1.msra.mxu0 0.0
    %448 = vmatprep.subr.mxu0 0.0
    %449 = vmatpush1.msra.mxu0 0.0
    %450 = vmatprep.subr.mxu0 0.0
    %451 = vmatpush1.msra.mxu0 0.0
    %452 = vmatprep.subr.mxu0 0.0
    %453 = vmatpush1.msra.mxu0 0.0
    %454 = vmatprep.subr.mxu0 0.0
    %455 = vmatpush1.msra.mxu0 0.0
    %456 = vmatprep.subr.mxu0 0.0
    %457 = vmatpush1.msra.mxu0 0.0
    %458 = vmatprep.subr.mxu0 0.0
    %459 = vmatpush1.msra.mxu0 0.0
    %460 = vmatprep.subr.mxu0 0.0
    %461 = vmatpush1.msra.mxu0 0.0
    %462 = vmatprep.subr.mxu0 0.0
    %463 = vmatpush1.msra.mxu0 0.0
    %464 = vmatprep.subr.mxu0 0.0
    %465 = vmatpush1.msra.mxu0 0.0
    %466 = vmatprep.subr.mxu0 0.0
    %467 = vmatpush1.msra.mxu0 0.0
    %468 = vmatprep.subr.mxu0 0.0
    %469 = vmatpush1.msra.mxu0 0.0
    %470 = vmatprep.subr.mxu0 0.0
    %471 = vmatpush1.msra.mxu0 0.0
    %472 = vmatprep.subr.mxu0 0.0
    %473 = vmatpush1.msra.mxu0 0.0
    %474 = vmatprep.subr.mxu0 0.0
    %475 = vmatpush1.msra.mxu0 0.0
    %476 = vmatprep.subr.mxu0 0.0
    %477 = vmatpush1.msra.mxu0 0.0
    %478 = vmatprep.subr.mxu0 0.0
    %479 = vmatpush1.msra.mxu0 0.0
    %480 = vmatprep.subr.mxu0 0.0
    %481 = vmatpush1.msra.mxu0 0.0
    %482 = vmatprep.subr.mxu0 0.0
    %483 = vmatpush1.msra.mxu0 0.0
    %484 = vmatprep.subr.mxu0 0.0
    %485 = vmatpush1.msra.mxu0 0.0
    %486 = vmatprep.subr.mxu0 0.0
    %487 = vmatpush1.msra.mxu0 0.0
    %488 = vmatprep.mubr.f32.mxu0 0.0
    %489 = vmatmul.mubr.f32.gmra.mrb[0].mxu0 %v419
    %v490 = vpop.f32.mrb[0].mxu0
    %v491 = vadd.f32 %v417, %v490
    %v492 = vpop.f32.mrb[0].mxu0
    %493 = vmatprep.mubr.f32.mxu0 0.0
    %494 = vmatmul.mubr.f32.gmra.mrb[0].mxu0 %v422
    %v495 = vpop.f32.mrb[0].mxu0
    %v496 = vadd.f32 %v417, %v495
    %v497 = vpop.f32.mrb[0].mxu0
    %498 = vdwg.mxu0
    %v499 = vmax.f32 %v491, 0.0
    %v500 = vmax.f32 %v496, 0.0
    %v501 = vld [vmem:[#allocation6 + $0x78] sm:$0xff]
    %v502 = vld [vmem:[#allocation6 + $0x80] sm:$0xff]
    %v503 = vld [vmem:[#allocation6 + $0x88] sm:$0xff]
    %v504 = vld [vmem:[#allocation6 + $0x90] sm:$0xff]
    %v505 = vld [vmem:[#allocation6 + $0x98] sm:$0xff]
    %v506 = vld [vmem:[#allocation6 + $0xa0] sm:$0xff]
    %v507 = vld [vmem:[#allocation6 + $0xa8] sm:$0xff]
    %v508 = vld [vmem:[#allocation6 + $0xb0] sm:$0xff]
    %v509 = vld [vmem:[#allocation6 + $0xb8] sm:$0x1]
    %v510 = vlaneseq
    %v511 = vshrl.u32 %v510, 7
    %v512 = vsub.s32 0, %v511
    %v513 = vrot.slane %v509, %v512
    %vm514 = vcmask 523264
    %v516 = vsel %vm514, %v499, 0
    %v519 = vsel %vm514, %v500, 0
    %521 = vmatprep.subr.mxu0 0.0
    %522 = vmatpush1.msra.mxu0 %v501
    %523 = vmatprep.subr.mxu0 0.0
    %524 = vmatpush1.msra.mxu0 %v502
    %525 = vmatprep.subr.mxu0 0.0
    %526 = vmatpush1.msra.mxu0 %v503
    %527 = vmatprep.subr.mxu0 0.0
    %528 = vmatpush1.msra.mxu0 %v504
    %529 = vmatprep.subr.mxu0 0.0
    %530 = vmatpush1.msra.mxu0 %v505
    %531 = vmatprep.subr.mxu0 0.0
    %532 = vmatpush1.msra.mxu0 %v506
    %533 = vmatprep.subr.mxu0 0.0
    %534 = vmatpush1.msra.mxu0 %v507
    %535 = vmatprep.subr.mxu0 0.0
    %536 = vmatpush1.msra.mxu0 %v508
    %537 = vmatprep.subr.mxu0 0.0
    %538 = vmatpush1.msra.mxu0 0.0
    %539 = vmatprep.subr.mxu0 0.0
    %540 = vmatpush1.msra.mxu0 0.0
    %541 = vmatprep.subr.mxu0 0.0
    %542 = vmatpush1.msra.mxu0 0.0
    %543 = vmatprep.subr.mxu0 0.0
    %544 = vmatpush1.msra.mxu0 0.0
    %545 = vmatprep.subr.mxu0 0.0
    %546 = vmatpush1.msra.mxu0 0.0
    %547 = vmatprep.subr.mxu0 0.0
    %548 = vmatpush1.msra.mxu0 0.0
    %549 = vmatprep.subr.mxu0 0.0
    %550 = vmatpush1.msra.mxu0 0.0
    %551 = vmatprep.subr.mxu0 0.0
    %552 = vmatpush1.msra.mxu0 0.0
    %553 = vmatprep.subr.mxu0 0.0
    %554 = vmatpush1.msra.mxu0 0.0
    %555 = vmatprep.subr.mxu0 0.0
    %556 = vmatpush1.msra.mxu0 0.0
    %557 = vmatprep.subr.mxu0 0.0
    %558 = vmatpush1.msra.mxu0 0.0
    %559 = vmatprep.subr.mxu0 0.0
    %560 = vmatpush1.msra.mxu0 0.0
    %561 = vmatprep.subr.mxu0 0.0
    %562 = vmatpush1.msra.mxu0 0.0
    %563 = vmatprep.subr.mxu0 0.0
    %564 = vmatpush1.msra.mxu0 0.0
    %565 = vmatprep.subr.mxu0 0.0
    %566 = vmatpush1.msra.mxu0 0.0
    %567 = vmatprep.subr.mxu0 0.0
    %568 = vmatpush1.msra.mxu0 0.0
    %569 = vmatprep.subr.mxu0 0.0
    %570 = vmatpush1.msra.mxu0 0.0
    %571 = vmatprep.subr.mxu0 0.0
    %572 = vmatpush1.msra.mxu0 0.0
    %573 = vmatprep.subr.mxu0 0.0
    %574 = vmatpush1.msra.mxu0 0.0
    %575 = vmatprep.subr.mxu0 0.0
    %576 = vmatpush1.msra.mxu0 0.0
    %577 = vmatprep.subr.mxu0 0.0
    %578 = vmatpush1.msra.mxu0 0.0
    %579 = vmatprep.subr.mxu0 0.0
    %580 = vmatpush1.msra.mxu0 0.0
    %581 = vmatprep.subr.mxu0 0.0
    %582 = vmatpush1.msra.mxu0 0.0
    %583 = vmatprep.subr.mxu0 0.0
    %584 = vmatpush1.msra.mxu0 0.0
    %585 = vmatprep.mubr.f32.mxu0 0.0
    %586 = vmatmul.mubr.f32.gmra.mrb[0].mxu0 %v516
    %v587 = vpop.f32.mrb[0].mxu0
    %v588 = vadd.f32 %v513, %v587
    %v589 = vpop.f32.mrb[0].mxu0
    %590 = vmatprep.mubr.f32.mxu0 0.0
    %591 = vmatmul.mubr.f32.gmra.mrb[0].mxu0 %v519
    %v592 = vpop.f32.mrb[0].mxu0
    %v593 = vadd.f32 %v513, %v592
    %v594 = vpop.f32.mrb[0].mxu0
    %595 = vdwg.mxu0
    %vm596 = vcmask 64512
    %597 = vst.msk [vmem:[%s3] sm:$0xff] %vm596, %v588
    %598 = vst.msk [vmem:[%s3 + $0x8] sm:$0xff] %vm596, %v593
    // Predicated region
    $region26: #{tpu_custom_call.1} parent=1 // pred_check
      _
    $region27: #{tpu_custom_call.1} parent=1 // pred_check_branch
      %600 = sbr.rel (0) target = $region29
    $region28: #{tpu_custom_call.1} parent=1 // pred_region
      _
    $region29: #{tpu_custom_call.1} parent=1 // pred_fallthru
      _
    // Predicated region
    $region30: #{tpu_custom_call.1} parent=1 // pred_check
      _
    $region31: #{tpu_custom_call.1} parent=1 // pred_check_branch
      %602 = sbr.rel (0) target = $region33
    $region32: #{tpu_custom_call.1} parent=1 // pred_region
      _
    $region33: #{tpu_custom_call.1} parent=1 // pred_fallthru
      _
    %603 = vsyncpa [#allocation3], 1
    %604 = vsyncpa [#allocation5], 1

</llo_original>
